<compile_context>
chip_gen: v6e
topology: v6e:2x2x1
jax: 0.10.0
libtpu: 0.0.40
codegen_flags: <defaults>
</compile_context>

<pallas_src>
import functools

import jax
import jax.numpy as jnp
from jax.experimental import pallas as pl
from jax.experimental.pallas import tpu as pltpu

_LANES = 128


def _kld_kernel(stu_ref, tea_ref, lab_ref, out_ref, acc_kl, acc_cnt,
                *, inv_temp, ignore_label, hw, tc):
    j = pl.program_id(1)
    n_j = pl.num_programs(1)

    @pl.when(j == 0)
    def _():
        acc_kl[...] = jnp.zeros_like(acc_kl)
        acc_cnt[...] = jnp.zeros_like(acc_cnt)

    s = stu_ref[0].astype(jnp.float32)          # (K, TC)
    t = tea_ref[0].astype(jnp.float32)          # (K, TC)
    lab = lab_ref[0]                            # (1, TC) int32

    # Column-validity guard (handles the ragged tail block without padding),
    # combined with the ignore-label mask.
    col = jax.lax.broadcasted_iota(jnp.int32, (1, tc), 1) + j * tc
    col_valid = col < hw                        # (1, TC) bool
    valid = jnp.logical_and(col_valid, lab != ignore_label)
    m = valid.astype(jnp.float32)               # (1, TC)

    # Sanitize out-of-range columns (could hold stale VMEM garbage) so that
    # exp/log stay finite; the result there is zeroed by `m` anyway.
    s = jnp.where(col_valid, s, 0.0) * inv_temp
    t = jnp.where(col_valid, t, 0.0) * inv_temp

    # log_softmax of student over channels (sublane axis 0).
    s_max = jnp.max(s, axis=0, keepdims=True)
    s_shift = s - s_max
    s_lse = jnp.log(jnp.sum(jnp.exp(s_shift), axis=0, keepdims=True))
    log_p_s = s_shift - s_lse                   # (K, TC)

    # softmax + log_softmax of teacher over channels.
    t_max = jnp.max(t, axis=0, keepdims=True)
    t_shift = t - t_max
    t_exp = jnp.exp(t_shift)
    t_sum = jnp.sum(t_exp, axis=0, keepdims=True)
    p_t = t_exp / t_sum                         # (K, TC)
    log_p_t = t_shift - jnp.log(t_sum)          # finite even when p_t underflows

    kl = p_t * (log_p_t - log_p_s)              # F.kl_div(input=log_p_s, target=p_t)

    # Pure VPU accumulation per step; single reduce in the epilogue.
    acc_kl[...] = acc_kl[...] + kl * m
    acc_cnt[...] = acc_cnt[...] + m

    @pl.when(j == n_j - 1)
    def _():
        kl_total = jnp.sum(acc_kl[...])
        cnt_total = jnp.sum(acc_cnt[...])
        out_ref[0:1, 0:1, :] = jnp.full((1, 1, _LANES), kl_total, jnp.float32)
        out_ref[0:1, 1:2, :] = jnp.full((1, 1, _LANES), cnt_total, jnp.float32)


@functools.partial(jax.jit, static_argnames=("temperature", "ignore_label"))
def _kld_call(stu3, tea3, lab3, *, temperature, ignore_label):
    B, K, HW = stu3.shape
    lab3 = lab3.astype(jnp.int32)

    # Spatial tile: lane-dense, ~2 MiB per input block (or the whole row).
    itemsize = jnp.dtype(stu3.dtype).itemsize
    tc = max(_LANES, ((2 * 1024 * 1024) // max(K * itemsize, 1)) // _LANES * _LANES)
    if HW <= tc:
        tc = HW
    ct = pl.cdiv(HW, tc)

    kernel = functools.partial(
        _kld_kernel,
        inv_temp=1.0 / float(temperature),
        ignore_label=int(ignore_label),
        hw=HW,
        tc=tc,
    )

    out = pl.pallas_call(
        kernel,
        out_shape=jax.ShapeDtypeStruct((B, 2, _LANES), jnp.float32),
        grid=(B, ct),
        in_specs=[
            pl.BlockSpec((1, K, tc), lambda b, j: (b, 0, j)),   # student logits
            pl.BlockSpec((1, K, tc), lambda b, j: (b, 0, j)),   # teacher logits
            pl.BlockSpec((1, 1, tc), lambda b, j: (b, 0, j)),   # labels
        ],
        out_specs=pl.BlockSpec((1, 2, _LANES), lambda b, j: (b, 0, 0)),
        scratch_shapes=[
            pltpu.VMEM((K, tc), jnp.float32),   # kl accumulator
            pltpu.VMEM((1, tc), jnp.float32),   # valid-pixel count accumulator
        ],
        compiler_params=pltpu.CompilerParams(
            dimension_semantics=("parallel", "arbitrary")),
    )(stu3, tea3, lab3)

    kl_sum = jnp.sum(out[:, 0, 0])
    cnt = jnp.sum(out[:, 1, 0])
    return kl_sum / (cnt + 1e-7)


def kld_loss(stu_out, tea_out, labels, temperature=2.0, ignore_label=255):
    """Matches KLDLoss.forward for (B,K,H,W) or (N,K) inputs."""
    if stu_out.shape != tea_out.shape:
        raise ValueError("stu_out and tea_out must have the same shape")
    if stu_out.ndim == 4:
        B, K, H, W = stu_out.shape
        stu3 = stu_out.reshape(B, K, H * W)         # metadata-only reshape
        tea3 = tea_out.reshape(B, K, H * W)
        lab3 = labels.reshape(B, 1, H * W)
    else:
        # (N, K) path: channels must land on the sublane axis -> one transpose.
        # TODO(synk): the 2-D path pays a wrapper-side transpose copy.
        N, K = stu_out.shape
        stu3 = stu_out.T.reshape(1, K, N)
        tea3 = tea_out.T.reshape(1, K, N)
        lab3 = labels.reshape(1, 1, N)
    return _kld_call(stu3, tea3, lab3,
                     temperature=float(temperature),
                     ignore_label=int(ignore_label))


def _reference(stu, tea, labels, temperature, ignore_label):
    K = stu.shape[1]
    s = jnp.transpose(stu, (0, 2, 3, 1)).reshape(-1, K).astype(jnp.float32)
    t = jnp.transpose(tea, (0, 2, 3, 1)).reshape(-1, K).astype(jnp.float32)
    lab = labels.reshape(-1, 1)
    m = (lab != ignore_label).astype(jnp.float32)
    log_p_s = jax.nn.log_softmax(s / temperature, axis=1)
    log_p_t = jax.nn.log_softmax(t / temperature, axis=1)
    p_t = jax.nn.softmax(t / temperature, axis=1)
    kl = p_t * (log_p_t - log_p_s)
    return jnp.sum(kl * m) / (jnp.sum(m) + 1e-7)


if __name__ == "__main__":
    key = jax.random.PRNGKey(0)
    k1, k2, k3, k4 = jax.random.split(key, 4)

    B, K, H, W = 2, 4, 16, 16
    stu = jax.random.normal(k1, (B, K, H, W), dtype=jnp.float32)
    tea = jax.random.normal(k2, (B, K, H, W), dtype=jnp.float32)
    labels = jax.random.randint(k3, (B, H, W), 0, K).astype(jnp.int32)
    ignore = jax.random.uniform(k4, (B, H, W)) < 0.2
    labels = jnp.where(ignore, 255, labels)

    out = kld_loss(stu, tea, labels, temperature=2.0, ignore_label=255)
    out = jax.block_until_ready(out)
    ref = _reference(stu, tea, labels, 2.0, 255)

    assert abs(float(out) - float(ref)) < 1e-4, (float(out), float(ref))
    print("KERNEL_OK")
</pallas_src>

<mosaic_0001>
module attributes {stable_mosaic.version = 11 : i64} {
  func.func @_kld_kernel(%arg0: i32, %arg1: i32, %arg2: memref<1x4x256xf32, #tpu.memory_space<vmem>>, %arg3: memref<1x4x256xf32, #tpu.memory_space<vmem>>, %arg4: memref<1x1x256xi32, #tpu.memory_space<vmem>>, %arg5: memref<1x2x128xf32, #tpu.memory_space<vmem>>, %arg6: memref<4x256xf32, #tpu.memory_space<vmem>>, %arg7: memref<1x256xf32, #tpu.memory_space<vmem>>) attributes {dimension_semantics = [#tpu.dimension_semantics<parallel>, #tpu.dimension_semantics<arbitrary>], iteration_bounds = array<i64: 2, 1>, scalar_prefetch = 0 : i64, scratch_operands = 2 : i64, tpu.core_type = #tpu.core_type<tc>, window_params = [{transform_indices = @transform_0, window_bounds = array<i64: 1, 4, 256>}, {transform_indices = @transform_1, window_bounds = array<i64: 1, 4, 256>}, {transform_indices = @transform_2, window_bounds = array<i64: 1, 1, 256>}, {transform_indices = @transform_3, window_bounds = array<i64: 1, 2, 128>}]} {
    %c0_i32 = arith.constant 0 : i32
    %0 = arith.cmpi eq, %arg1, %c0_i32 : i32
    %1 = arith.extui %0 : i1 to i32
    %c0_i32_0 = arith.constant 0 : i32
    %2 = arith.cmpi ne, %1, %c0_i32_0 : i32
    scf.if %2 {
      %cst_27 = arith.constant 0.000000e+00 : f32
      %67 = vector.broadcast %cst_27 : f32 to vector<4x256xf32>
      %c0_28 = arith.constant 0 : index
      %c0_29 = arith.constant 0 : index
      %68 = vector.load %arg6[%c0_28, %c0_29] : memref<4x256xf32, #tpu.memory_space<vmem>>, vector<4x256xf32>
      tpu.vector_store %arg6[%c0_28, %c0_29], %67 {strides = array<i32>} : memref<4x256xf32, #tpu.memory_space<vmem>>, vector<4x256xf32>,
      %cst_30 = arith.constant 0.000000e+00 : f32
      %69 = vector.broadcast %cst_30 : f32 to vector<1x256xf32>
      %c0_31 = arith.constant 0 : index
      %c0_32 = arith.constant 0 : index
      %70 = vector.load %arg7[%c0_31, %c0_32] : memref<1x256xf32, #tpu.memory_space<vmem>>, vector<1x256xf32>
      tpu.vector_store %arg7[%c0_31, %c0_32], %69 {strides = array<i32>} : memref<1x256xf32, #tpu.memory_space<vmem>>, vector<1x256xf32>,
    } else {
    }
    %c0 = arith.constant 0 : index
    %c0_1 = arith.constant 0 : index
    %c0_2 = arith.constant 0 : index
    %3 = vector.load %arg2[%c0, %c0_1, %c0_2] : memref<1x4x256xf32, #tpu.memory_space<vmem>>, vector<1x4x256xf32>
    %4 = vector.shape_cast %3 : vector<1x4x256xf32> to vector<4x256xf32>
    %c0_3 = arith.constant 0 : index
    %c0_4 = arith.constant 0 : index
    %c0_5 = arith.constant 0 : index
    %5 = vector.load %arg3[%c0_3, %c0_4, %c0_5] : memref<1x4x256xf32, #tpu.memory_space<vmem>>, vector<1x4x256xf32>
    %6 = vector.shape_cast %5 : vector<1x4x256xf32> to vector<4x256xf32>
    %c0_6 = arith.constant 0 : index
    %c0_7 = arith.constant 0 : index
    %c0_8 = arith.constant 0 : index
    %7 = vector.load %arg4[%c0_6, %c0_7, %c0_8] : memref<1x1x256xi32, #tpu.memory_space<vmem>>, vector<1x1x256xi32>
    %8 = vector.shape_cast %7 : vector<1x1x256xi32> to vector<1x256xi32>
    %9 = tpu.iota {dimensions = array<i32: 1>} : vector<1x256xi32>
    %c256_i32 = arith.constant 256 : i32
    %10 = arith.muli %arg1, %c256_i32 : i32
    %11 = vector.broadcast %10 : i32 to vector<1x256xi32>
    %12 = arith.addi %9, %11 : vector<1x256xi32>
    %c256_i32_9 = arith.constant 256 : i32
    %13 = vector.broadcast %c256_i32_9 : i32 to vector<1x256xi32>
    %14 = arith.cmpi slt, %12, %13 : vector<1x256xi32>
    %c255_i32 = arith.constant 255 : i32
    %15 = vector.broadcast %c255_i32 : i32 to vector<1x256xi32>
    %16 = arith.cmpi ne, %8, %15 : vector<1x256xi32>
    %17 = arith.andi %14, %16 : vector<1x256xi1>
    %18 = arith.extui %17 : vector<1x256xi1> to vector<1x256xi32>
    %19 = arith.sitofp %18 : vector<1x256xi32> to vector<1x256xf32>
    %cst = arith.constant 0.000000e+00 : f32
    %20 = vector.shape_cast %14 : vector<1x256xi1> to vector<1x256xi1>
    %21 = vector.broadcast %20 : vector<1x256xi1> to vector<4x256xi1>
    %22 = vector.broadcast %cst : f32 to vector<4x256xf32>
    %23 = arith.select %21, %4, %22 : vector<4x256xi1>, vector<4x256xf32>
    %cst_10 = arith.constant 5.000000e-01 : f32
    %24 = vector.broadcast %cst_10 : f32 to vector<4x256xf32>
    %25 = arith.mulf %23, %24 : vector<4x256xf32>
    %cst_11 = arith.constant 0.000000e+00 : f32
    %26 = vector.shape_cast %14 : vector<1x256xi1> to vector<1x256xi1>
    %27 = vector.broadcast %26 : vector<1x256xi1> to vector<4x256xi1>
    %28 = vector.broadcast %cst_11 : f32 to vector<4x256xf32>
    %29 = arith.select %27, %6, %28 : vector<4x256xi1>, vector<4x256xf32>
    %cst_12 = arith.constant 5.000000e-01 : f32
    %30 = vector.broadcast %cst_12 : f32 to vector<4x256xf32>
    %31 = arith.mulf %29, %30 : vector<4x256xf32>
    %cst_13 = arith.constant dense<0xFF800000> : vector<256xf32>
    %32 = vector.multi_reduction <maximumf>, %25, %cst_13 [0] : vector<4x256xf32> to vector<256xf32>
    %33 = vector.shape_cast %32 : vector<256xf32> to vector<1x256xf32>
    %34 = vector.broadcast %33 : vector<1x256xf32> to vector<4x256xf32>
    %35 = arith.subf %25, %34 : vector<4x256xf32>
    %36 = math.exp %35 : vector<4x256xf32>
    %cst_14 = arith.constant dense<0.000000e+00> : vector<256xf32>
    %37 = vector.multi_reduction <add>, %36, %cst_14 [0] : vector<4x256xf32> to vector<256xf32>
    %38 = vector.shape_cast %37 : vector<256xf32> to vector<1x256xf32>
    %39 = math.log %38 : vector<1x256xf32>
    %40 = vector.broadcast %39 : vector<1x256xf32> to vector<4x256xf32>
    %41 = arith.subf %35, %40 : vector<4x256xf32>
    %cst_15 = arith.constant dense<0xFF800000> : vector<256xf32>
    %42 = vector.multi_reduction <maximumf>, %31, %cst_15 [0] : vector<4x256xf32> to vector<256xf32>
    %43 = vector.shape_cast %42 : vector<256xf32> to vector<1x256xf32>
    %44 = vector.broadcast %43 : vector<1x256xf32> to vector<4x256xf32>
    %45 = arith.subf %31, %44 : vector<4x256xf32>
    %46 = math.exp %45 : vector<4x256xf32>
    %cst_16 = arith.constant dense<0.000000e+00> : vector<256xf32>
    %47 = vector.multi_reduction <add>, %46, %cst_16 [0] : vector<4x256xf32> to vector<256xf32>
    %48 = vector.shape_cast %47 : vector<256xf32> to vector<1x256xf32>
    %49 = vector.broadcast %48 : vector<1x256xf32> to vector<4x256xf32>
    %50 = arith.divf %46, %49 : vector<4x256xf32>
    %51 = math.log %48 : vector<1x256xf32>
    %52 = vector.broadcast %51 : vector<1x256xf32> to vector<4x256xf32>
    %53 = arith.subf %45, %52 : vector<4x256xf32>
    %54 = arith.subf %53, %41 : vector<4x256xf32>
    %55 = arith.mulf %50, %54 : vector<4x256xf32>
    %c0_17 = arith.constant 0 : index
    %c0_18 = arith.constant 0 : index
    %56 = vector.load %arg6[%c0_17, %c0_18] : memref<4x256xf32, #tpu.memory_space<vmem>>, vector<4x256xf32>
    %57 = vector.broadcast %19 : vector<1x256xf32> to vector<4x256xf32>
    %58 = arith.mulf %55, %57 : vector<4x256xf32>
    %59 = arith.addf %56, %58 : vector<4x256xf32>
    %c0_19 = arith.constant 0 : index
    %c0_20 = arith.constant 0 : index
    %60 = vector.load %arg6[%c0_19, %c0_20] : memref<4x256xf32, #tpu.memory_space<vmem>>, vector<4x256xf32>
    tpu.vector_store %arg6[%c0_19, %c0_20], %59 {strides = array<i32>} : memref<4x256xf32, #tpu.memory_space<vmem>>, vector<4x256xf32>,
    %c0_21 = arith.constant 0 : index
    %c0_22 = arith.constant 0 : index
    %61 = vector.load %arg7[%c0_21, %c0_22] : memref<1x256xf32, #tpu.memory_space<vmem>>, vector<1x256xf32>
    %62 = arith.addf %61, %19 : vector<1x256xf32>
    %c0_23 = arith.constant 0 : index
    %c0_24 = arith.constant 0 : index
    %63 = vector.load %arg7[%c0_23, %c0_24] : memref<1x256xf32, #tpu.memory_space<vmem>>, vector<1x256xf32>
    tpu.vector_store %arg7[%c0_23, %c0_24], %62 {strides = array<i32>} : memref<1x256xf32, #tpu.memory_space<vmem>>, vector<1x256xf32>,
    %c0_i32_25 = arith.constant 0 : i32
    %64 = arith.cmpi eq, %arg1, %c0_i32_25 : i32
    %65 = arith.extui %64 : i1 to i32
    %c0_i32_26 = arith.constant 0 : i32
    %66 = arith.cmpi ne, %65, %c0_i32_26 : i32
    scf.if %66 {
      %c0_27 = arith.constant 0 : index
      %c0_28 = arith.constant 0 : index
      %67 = vector.load %arg6[%c0_27, %c0_28] : memref<4x256xf32, #tpu.memory_space<vmem>>, vector<4x256xf32>
      %68 = vector.shape_cast %67 : vector<4x256xf32> to vector<1x4x256xf32>
      %cst_29 = arith.constant dense<0.000000e+00> : vector<1xf32>
      %69 = vector.multi_reduction <add>, %68, %cst_29 [1, 2] : vector<1x4x256xf32> to vector<1xf32>
      %70 = vector.shape_cast %69 : vector<1xf32> to vector<1x1x1xf32>
      %71 = vector.extract %70[0, 0, 0] : f32 from vector<1x1x1xf32>
      %c0_30 = arith.constant 0 : index
      %c0_31 = arith.constant 0 : index
      %72 = vector.load %arg7[%c0_30, %c0_31] : memref<1x256xf32, #tpu.memory_space<vmem>>, vector<1x256xf32>
      %73 = vector.shape_cast %72 : vector<1x256xf32> to vector<1x1x256xf32>
      %cst_32 = arith.constant dense<0.000000e+00> : vector<1xf32>
      %74 = vector.multi_reduction <add>, %73, %cst_32 [1, 2] : vector<1x1x256xf32> to vector<1xf32>
      %75 = vector.shape_cast %74 : vector<1xf32> to vector<1x1x1xf32>
      %76 = vector.extract %75[0, 0, 0] : f32 from vector<1x1x1xf32>
      %77 = vector.broadcast %71 : f32 to vector<1x1x128xf32>
      %c0_33 = arith.constant 0 : index
      %c0_34 = arith.constant 0 : index
      %c0_35 = arith.constant 0 : index
      %78 = vector.load %arg5[%c0_33, %c0_34, %c0_35] : memref<1x2x128xf32, #tpu.memory_space<vmem>>, vector<1x1x128xf32>
      tpu.vector_store %arg5[%c0_33, %c0_34, %c0_35], %77 {strides = array<i32>} : memref<1x2x128xf32, #tpu.memory_space<vmem>>, vector<1x1x128xf32>,
      %79 = vector.broadcast %76 : f32 to vector<1x1x128xf32>
      %c0_36 = arith.constant 0 : index
      %c1 = arith.constant 1 : index
      %c0_37 = arith.constant 0 : index
      %80 = vector.load %arg5[%c0_36, %c1, %c0_37] : memref<1x2x128xf32, #tpu.memory_space<vmem>>, vector<1x1x128xf32>
      tpu.vector_store %arg5[%c0_36, %c1, %c0_37], %79 {strides = array<i32>} : memref<1x2x128xf32, #tpu.memory_space<vmem>>, vector<1x1x128xf32>,
    } else {
    }
    return
  }
  func.func @transform_0(%arg0: i32, %arg1: i32) -> (i32, i32, i32) {
    %c0_i32 = arith.constant 0 : i32
    %c0_i32_0 = arith.constant 0 : i32
    return %arg0, %c0_i32, %arg1 : i32, i32, i32
  }
  func.func @transform_1(%arg0: i32, %arg1: i32) -> (i32, i32, i32) {
    %c0_i32 = arith.constant 0 : i32
    %c0_i32_0 = arith.constant 0 : i32
    return %arg0, %c0_i32, %arg1 : i32, i32, i32
  }
  func.func @transform_2(%arg0: i32, %arg1: i32) -> (i32, i32, i32) {
    %c0_i32 = arith.constant 0 : i32
    %c0_i32_0 = arith.constant 0 : i32
    return %arg0, %c0_i32, %arg1 : i32, i32, i32
  }
  func.func @transform_3(%arg0: i32, %arg1: i32) -> (i32, i32, i32) {
    %c0_i32 = arith.constant 0 : i32
    %c0_i32_0 = arith.constant 0 : i32
    %c0_i32_1 = arith.constant 0 : i32
    return %arg0, %c0_i32, %c0_i32_0 : i32, i32, i32
  }
}

</mosaic_0001>

<llo_original>
// kernel: _kld_call.1
$region0: #{_kld_call.1}
  #allocation0 [shape = 'u32[]', space=smem, size = 0x4, offset = 0x4, fixed_abs, tag = 'smem constant byte address 0x4 - core index']
  #allocation1 [shape = 'u32[144,128]{1,0:T(1,128)}', space=vmem, size = 0x12000, scoped, tag = 'internal scratch']
  #allocation2 [shape = 'f32[4,256]{1,0:T(4,128)}', space=vmem, size = 0x1000, scoped, tag = 'scratch operand']
  #allocation3 [shape = 'f32[1,256]{1,0:T(1,128)}', space=vmem, size = 0x400, scoped, tag = 'scratch operand']
  %s0 = inlined_call_operand.hbm [shape: f32[2,4,256], index: 0, kind: input, shape index: {}]
  %s1 = inlined_call_operand.hbm [shape: f32[2,4,256], index: 1, kind: input, shape index: {}]
  %s2 = inlined_call_operand.hbm [shape: s32[2,1,256], index: 2, kind: input, shape index: {}]
  %s3 = inlined_call_operand.vmem [shape: f32[2,2,128], index: 3, kind: output, shape index: {}]
  %s4 = sld [smem:[#allocation0]]
  $region65: #{_kld_call.1} parent=0
    _
  %s6 = ssub.s32 1, %s4
  %s7 = scalar_select 0, %s6, %s4
  $region1: #{_kld_call.1} parent=0
    #allocation4 [shape = 'u8[8192]{0}', space=vmem, size = 0x2000, scoped, tag = 'input window, operand 0']
    #allocation5 [shape = 's32[2]{0}', space=sflag, size = 0x8, scoped, tag = 'scoped memory for _kld_call.1']
    #allocation6 [shape = 'u8[8192]{0}', space=vmem, size = 0x2000, scoped, tag = 'input window, operand 1']
    #allocation7 [shape = 's32[2]{0}', space=sflag, size = 0x8, scoped, tag = 'scoped memory for _kld_call.1']
    #allocation8 [shape = 'u8[2048]{0}', space=vmem, size = 0x800, scoped, tag = 'input window, operand 2']
    %8 = vsyncpa [#allocation5], 0
    %s9 = scalar_lea.sflag [#allocation5], 1
    %10 = vsyncpa %s9, 0
    %11 = vsyncpa [#allocation7], 0
    %s12 = scalar_lea.sflag [#allocation7], 1
    %13 = vsyncpa %s12, 0
    loop: start=0, step=1, limit=4
    $region2: #{_kld_call.1} parent=1 // loop_pre_header
      _
    $region3: #{_kld_call.1} parent=1 // loop_header
      %s15 = sphi 0, %s19
      %p16 = scmp.ge.s32.totalorder %s15, 4
      %s22 = sphi 0, %s34
      %s23 = sphi 0, %s30
      %s24 = sphi 0, %s22
      %s25 = sphi 0, %s23
      %s26 = sphi 0, %s24
      %s27 = sphi 0, %s25
      %s39 = sphi 0, %s41
      %s42 = sphi 0, %s39
      %s43 = sphi 0, %s42
      %s59 = sphi 0, %s43
      %s67 = sphi 0, %s69
      %s70 = sphi 0, %s67
      %s71 = sphi 0, %s70
      %s87 = sphi 0, %s71
      %s95 = sphi 0, %s97
      %s98 = sphi 0, %s95
      %s99 = sphi 0, %s98
      %s115 = sphi 0, %s99
      %s121 = sphi 0, %s123
      %s124 = sphi 0, %s121
      %s125 = sphi 0, %s124
      %s141 = sphi 0, %s125
    $region4: #{_kld_call.1} parent=1 // loop_header_branch
      %18 = sbr.rel (%p16) target = $region8
    $region5: #{_kld_call.1} parent=1 // loop_body
      %s20 = ssub.s32 %s15, 1
      %s21 = ssub.s32 %s15, 2
      %s28 = sadd.s32 1, %s23
      %p29 = scmp.ge.s32.totalorder %s28, 1
      %s30 = scalar_select %p29, 0, %s28
      %s31 = sadd.s32 1, %s22
      %s32 = scalar_select %p29, %s31, %s22
      %p33 = scmp.ge.s32.totalorder %s32, 2
      %s34 = scalar_select %p33, 0, %s32
      %s35 = ssub.s32 %s22, %s34
      %s36 = ssub.s32 %s23, %s30
      %s37 = sor.u32 %s35, %s36
      %p38 = scmp.eq.s32.totalorder %s37, 0
      %s40 = sadd.s32 %s39, 1
      %s41 = scalar_select %p38, %s39, %s40
      %p44 = pneg %p38
      %p45 = scmp.eq.s32.totalorder %s15, 1
      %p46 = por %p44, %p45
      %p47 = scmp.ne.s32.totalorder %s39, %s42
      %p48 = scmp.eq.s32.totalorder %s15, 0
      %p49 = por %p47, %p48
      %p50 = scmp.ne.s32.totalorder %s39, %s42
      %p51 = scmp.eq.s32.totalorder %s20, 1
      %p52 = por %p50, %p51
      %p53 = scmp.ne.s32.totalorder %s42, %s43
      %p54 = scmp.eq.s32.totalorder %s20, 0
      %p55 = por %p53, %p54
      %p56 = scmp.ne.s32.totalorder %s42, %s43
      %p57 = scmp.eq.s32.totalorder %s21, 1
      %p58 = por %p56, %p57
      %p60 = scmp.ne.s32.totalorder %s43, %s59
      %p61 = scmp.eq.s32.totalorder %s21, 0
      %p62 = por %p60, %p61
      %s63 = ssub.s32 %s22, %s34
      %s64 = ssub.s32 %s23, %s30
      %s65 = sor.u32 %s63, %s64
      %p66 = scmp.eq.s32.totalorder %s65, 0
      %s68 = sadd.s32 %s67, 1
      %s69 = scalar_select %p66, %s67, %s68
      %p72 = pneg %p66
      %p73 = scmp.eq.s32.totalorder %s15, 1
      %p74 = por %p72, %p73
      %p75 = scmp.ne.s32.totalorder %s67, %s70
      %p76 = scmp.eq.s32.totalorder %s15, 0
      %p77 = por %p75, %p76
      %p78 = scmp.ne.s32.totalorder %s67, %s70
      %p79 = scmp.eq.s32.totalorder %s20, 1
      %p80 = por %p78, %p79
      %p81 = scmp.ne.s32.totalorder %s70, %s71
      %p82 = scmp.eq.s32.totalorder %s20, 0
      %p83 = por %p81, %p82
      %p84 = scmp.ne.s32.totalorder %s70, %s71
      %p85 = scmp.eq.s32.totalorder %s21, 1
      %p86 = por %p84, %p85
      %p88 = scmp.ne.s32.totalorder %s71, %s87
      %p89 = scmp.eq.s32.totalorder %s21, 0
      %p90 = por %p88, %p89
      %s91 = ssub.s32 %s22, %s34
      %s92 = ssub.s32 %s23, %s30
      %s93 = sor.u32 %s91, %s92
      %p94 = scmp.eq.s32.totalorder %s93, 0
      %s96 = sadd.s32 %s95, 1
      %s97 = scalar_select %p94, %s95, %s96
      %p100 = pneg %p94
      %p101 = scmp.eq.s32.totalorder %s15, 1
      %p102 = por %p100, %p101
      %p103 = scmp.ne.s32.totalorder %s95, %s98
      %p104 = scmp.eq.s32.totalorder %s15, 0
      %p105 = por %p103, %p104
      %p106 = scmp.ne.s32.totalorder %s95, %s98
      %p107 = scmp.eq.s32.totalorder %s20, 1
      %p108 = por %p106, %p107
      %p109 = scmp.ne.s32.totalorder %s98, %s99
      %p110 = scmp.eq.s32.totalorder %s20, 0
      %p111 = por %p109, %p110
      %p112 = scmp.ne.s32.totalorder %s98, %s99
      %p113 = scmp.eq.s32.totalorder %s21, 1
      %p114 = por %p112, %p113
      %p116 = scmp.ne.s32.totalorder %s99, %s115
      %p117 = scmp.eq.s32.totalorder %s21, 0
      %p118 = por %p116, %p117
      %s119 = ssub.s32 %s22, %s34
      %p120 = scmp.eq.s32.totalorder %s119, 0
      %s122 = sadd.s32 %s121, 1
      %s123 = scalar_select %p120, %s121, %s122
      %p126 = pneg %p120
      %p127 = scmp.eq.s32.totalorder %s15, 1
      %p128 = por %p126, %p127
      %p129 = scmp.ne.s32.totalorder %s121, %s124
      %p130 = scmp.eq.s32.totalorder %s15, 0
      %p131 = por %p129, %p130
      %p132 = scmp.ne.s32.totalorder %s121, %s124
      %p133 = scmp.eq.s32.totalorder %s20, 1
      %p134 = por %p132, %p133
      %p135 = scmp.ne.s32.totalorder %s124, %s125
      %p136 = scmp.eq.s32.totalorder %s20, 0
      %p137 = por %p135, %p136
      %p138 = scmp.ne.s32.totalorder %s124, %s125
      %p139 = scmp.eq.s32.totalorder %s21, 1
      %p140 = por %p138, %p139
      %p142 = scmp.ne.s32.totalorder %s125, %s141
      %p143 = scmp.eq.s32.totalorder %s21, 0
      %p144 = por %p142, %p143
      %p145 = scmp.le.s32.totalorder 1, %s15
      %p146 = scmp.lt.s32.totalorder %s15, 3
      %p147 = pnand %p145, %p146
      %p148 = pneg %p147
      // Predicated region
      $region9: #{_kld_call.1} parent=5 // pred_check
        _
      $region10: #{_kld_call.1} parent=5 // pred_check_branch
        %150 = sbr.rel (%p147) target = $region12
      $region11: #{_kld_call.1} parent=5 // pred_region
        %s151 = ssub.s32 %s15, 1
      $region12: #{_kld_call.1} parent=5 // pred_fallthru
        _
      %p152 = scmp.lt.s32.totalorder %s15, 2
      // Predicated region
      $region13: #{_kld_call.1} parent=5 // pred_check
        %p153 = pneg %p152
      $region14: #{_kld_call.1} parent=5 // pred_check_branch
        %155 = sbr.rel (%p153) target = $region16
      $region15: #{_kld_call.1} parent=5 // pred_region
        // Predicated region
        $region17: #{_kld_call.1} parent=15 // pred_check
          %p156 = pneg %p49
        $region18: #{_kld_call.1} parent=15 // pred_check_branch
          %158 = sbr.rel (%p156) target = $region20
        $region19: #{_kld_call.1} parent=15 // pred_region
          %s159 = sand.u32 %s39, 1
          %s160 = scalar_lea.sflag [#allocation5], %s159
          %s161 = sand.u32 %s39, 1
          %s162 = smul.addr %s161, 8
          %s163 = scalar_lea.vmem [#allocation4], %s162
          %s164 = smul.u32 2, %s23
          %s166 = ssub.s32 128, 128
          %167 = vsyncadd %s160, %s166
          %s168 = smul.addr %s22, 2
          %s169 = sadd.s32 %s164, %s168
          %s170 = smul.addr %s169, 64
          %s171 = scalar_lea.hbm %s0, %s170
          %s173 = sshll.u32 %s163, 4
          %s174 = int_to_ptr.vmem [resolvable:$true] %s173
          %176 = dma.hbm_to_vmem [thread:$0]  %s171, 128, %s174, %s160
        $region20: #{_kld_call.1} parent=15 // pred_fallthru
          _
        // Predicated region
        $region21: #{_kld_call.1} parent=15 // pred_check
          %p177 = pneg %p77
        $region22: #{_kld_call.1} parent=15 // pred_check_branch
          %179 = sbr.rel (%p177) target = $region24
        $region23: #{_kld_call.1} parent=15 // pred_region
          %s180 = sand.u32 %s15, 1
          %s181 = scalar_lea.sflag [#allocation7], %s180
          %s182 = sand.u32 %s67, 1
          %s183 = smul.addr %s182, 8
          %s184 = scalar_lea.vmem [#allocation6], %s183
          %s185 = smul.u32 2, %s23
          %s187 = ssub.s32 128, 128
          %188 = vsyncadd %s181, %s187
          %s189 = smul.addr %s22, 2
          %s190 = sadd.s32 %s185, %s189
          %s191 = smul.addr %s190, 64
          %s192 = scalar_lea.hbm %s1, %s191
          %s194 = sshll.u32 %s184, 4
          %s195 = int_to_ptr.vmem [resolvable:$true] %s194
          %197 = dma.hbm_to_vmem [thread:$0]  %s192, 128, %s195, %s181
        $region24: #{_kld_call.1} parent=15 // pred_fallthru
          _
        // Predicated region
        $region25: #{_kld_call.1} parent=15 // pred_check
          %p198 = pneg %p105
        $region26: #{_kld_call.1} parent=15 // pred_check_branch
          %200 = sbr.rel (%p198) target = $region28
        $region27: #{_kld_call.1} parent=15 // pred_region
          %s201 = sand.u32 %s15, 1
          %s202 = scalar_lea.sflag [#allocation7], %s201
          %s203 = sand.u32 %s95, 1
          %s204 = smul.addr %s203, 2
          %s205 = scalar_lea.vmem [#allocation8], %s204
          %s206 = smul.u32 2, %s23
          %s208 = ssub.s32 32, 32
          %209 = vsyncadd %s202, %s208
          %s210 = smul.addr %s22, 2
          %s211 = sadd.s32 %s206, %s210
          %s212 = smul.addr %s211, 16
          %s213 = scalar_lea.hbm %s2, %s212
          %s215 = sshll.u32 %s205, 4
          %s216 = int_to_ptr.vmem [resolvable:$true] %s215
          %218 = dma.hbm_to_vmem [thread:$0]  %s213, 32, %s216, %s202
        $region28: #{_kld_call.1} parent=15 // pred_fallthru
          _
      $region16: #{_kld_call.1} parent=5 // pred_fallthru
        _
      %p219 = scmp.le.s32.totalorder 1, %s15
      %p220 = scmp.lt.s32.totalorder %s15, 3
      %p221 = pnand %p219, %p220
      %p222 = pneg %p221
      // Predicated region
      $region29: #{_kld_call.1} parent=5 // pred_check
        _
      $region30: #{_kld_call.1} parent=5 // pred_check_branch
        %224 = sbr.rel (%p221) target = $region32
      $region31: #{_kld_call.1} parent=5 // pred_region
        %s225 = ssub.s32 %s15, 1
        %s226 = sand.u32 %s42, 1
        %s227 = scalar_lea.sflag [#allocation5], %s226
        %s228 = sand.u32 %s42, 1
        %s229 = smul.addr %s228, 8
        %s230 = scalar_lea.vmem [#allocation4], %s229
        // Predicated region
        $region33: #{_kld_call.1} parent=31 // pred_check
          %p231 = pneg %p55
        $region34: #{_kld_call.1} parent=31 // pred_check_branch
          %233 = sbr.rel (%p231) target = $region36
        $region35: #{_kld_call.1} parent=31 // pred_region
          %234 = dma.done %s227, 128
        $region36: #{_kld_call.1} parent=31 // pred_fallthru
          _
        %s235 = sand.u32 %s20, 1
        %s236 = scalar_lea.sflag [#allocation7], %s235
        %s237 = sand.u32 %s70, 1
        %s238 = smul.addr %s237, 8
        %s239 = scalar_lea.vmem [#allocation6], %s238
        // Predicated region
        $region37: #{_kld_call.1} parent=31 // pred_check
          %p240 = pneg %p83
        $region38: #{_kld_call.1} parent=31 // pred_check_branch
          %242 = sbr.rel (%p240) target = $region40
        $region39: #{_kld_call.1} parent=31 // pred_region
          %243 = dma.done %s236, 128
        $region40: #{_kld_call.1} parent=31 // pred_fallthru
          _
        %s244 = sand.u32 %s20, 1
        %s245 = scalar_lea.sflag [#allocation7], %s244
        %s246 = sand.u32 %s98, 1
        %s247 = smul.addr %s246, 2
        %s248 = scalar_lea.vmem [#allocation8], %s247
        // Predicated region
        $region41: #{_kld_call.1} parent=31 // pred_check
          %p249 = pneg %p111
        $region42: #{_kld_call.1} parent=31 // pred_check_branch
          %251 = sbr.rel (%p249) target = $region44
        $region43: #{_kld_call.1} parent=31 // pred_region
          %252 = dma.done %s245, 32
        $region44: #{_kld_call.1} parent=31 // pred_fallthru
          _
        %s253 = sand.u32 %s42, 1
        %s254 = scalar_lea.sflag [#allocation5], %s253
        %s255 = sand.u32 %s42, 1
        %s256 = smul.addr %s255, 8
        %s257 = scalar_lea.vmem [#allocation4], %s256
        %p258 = pneg %p55
        %p259 = pneg %p52
        %s260 = sand.u32 %s20, 1
        %s261 = scalar_lea.sflag [#allocation7], %s260
        %s262 = sand.u32 %s70, 1
        %s263 = smul.addr %s262, 8
        %s264 = scalar_lea.vmem [#allocation6], %s263
        %p265 = pneg %p83
        %p266 = pneg %p80
        %s267 = sand.u32 %s20, 1
        %s268 = scalar_lea.sflag [#allocation7], %s267
        %s269 = sand.u32 %s98, 1
        %s270 = smul.addr %s269, 2
        %s271 = scalar_lea.vmem [#allocation8], %s270
        %p272 = pneg %p111
        %p273 = pneg %p108
        %p274 = pneg %p137
        %p275 = pneg %p134
        %p276 = scmp.lt.s32.totalorder %s24, 1
        %s277 = scalar_select %p276, %s24, 1
        %s278 = smul.addr %s277, 2
        %s279 = scalar_lea.vmem %s3, %s278
        %s280 = smul.u32 2, %s25
        %s281 = smul.u32 2, %s25
        %s282 = smul.u32 2, %s25
        %p283 = scmp.lt.s32.totalorder %s24, 1
        %s284 = scalar_select %p283, %s24, 1
        %s285 = smul.addr %s284, 2
        %s286 = scalar_lea.vmem %s3, %s285
        %p287 = scmp.eq.s32.totalorder %s25, 0
        // Predicated region
        $region45: #{_kld_call.1} parent=31 // pred_check
          %p288 = pneg %p287
        $region46: #{_kld_call.1} parent=31 // pred_check_branch
          %290 = sbr.rel (%p288) target = $region48
        $region47: #{_kld_call.1} parent=31 // pred_region
          %291 = vst [vmem:[#allocation2] sm:$0xff] 0.0
          %v292 = vlaneseq
          %vm293 = vcmp.ge.s32.totalorder %v292, 0
          %vm294 = vcmp.lt.s32.totalorder %v292, 256
          %vm295 = vmand %vm293, %vm294
          %296 = vst.msk [vmem:[#allocation3] sm:$0x3] %vm295, 0.0
        $region48: #{_kld_call.1} parent=31 // pred_fallthru
          _
        %v297 = vld [vmem:[%s230] sm:$0xff]
        %v298 = vld [vmem:[%s239] sm:$0xff]
        %v299 = vld [vmem:[%s248] sm:$0x3]
        %v300 = vlaneseq
        %v301 = vand.u32 %v300, 127
        %v302 = vadd.s32 %v301, 128
        %s303 = smul.u32 %s25, 256
        %v304 = vstv %s303
        %v305 = vadd.s32 %v301, %v304
        %v306 = vadd.s32 %v302, %v304
        %vm307 = vcmp.lt.s32.totalorder %v305, 256
        %vm308 = vcmp.lt.s32.totalorder %v306, 256
        %vm309 = vcmp.ne.s32.totalorder %v299, 255
        %v310 = vsel %vm309, 1, 0
        %v311 = vlaneseq
        %v312 = vshrl.u32 %v311, 7
        %v313 = vsub.s32 0, %v312
        %v314 = vrot.slane %v310, %v313
        %v315 = vlaneseq
        %v316 = vshrl.u32 %v315, 7
        %v317 = vsub.s32 1, %v316
        %v318 = vrot.slane %v310, %v317
        %vm319 = vcmp.ne.s32.totalorder %v314, 0
        %vm320 = vcmp.ne.s32.totalorder %v318, 0
        %vm321 = vmand %vm307, %vm319
        %vm322 = vmand %vm308, %vm320
        %v323 = vsel %vm321, 1, 0
        %v324 = vsel %vm322, 1, 0
        %v325 = vcvt.s32.f32 %v323
        %v326 = vcvt.s32.f32 %v324
        %v327 = vsel %vm307, 1, 0
        %v328 = vsel %vm308, 1, 0
        %vm329 = vcmp.eq.s32.totalorder %v327, 1
        %vm330 = vcmp.eq.s32.totalorder %v328, 1
        %v332 = vcombine.high %v297, %v297
        %v334 = vsel %vm329, %v297, 0.0
        %v335 = vsel %vm330, %v332, 0.0
        %v336 = vmul.f32 %v334, 0.5
        %v337 = vmul.f32 %v335, 0.5
        %v339 = vcombine.high %v298, %v298
        %v341 = vsel %vm329, %v298, 0.0
        %v342 = vsel %vm330, %v339, 0.0
        %v343 = vmul.f32 %v341, 0.5
        %v344 = vmul.f32 %v342, 0.5
        %vm345 = vcmask 1043456
        %v346 = vsel %vm345, %v336, -inf
        %v347 = vrot.slane %v346, 4
        %v348 = vmax.f32 %v346, %v347
        %v349 = vrot.slane %v348, 2
        %v350 = vmax.f32 %v348, %v349
        %v351 = vrot.slane %v350, 1
        %v352 = vmax.f32 %v350, %v351
        %v353 = vsel %vm345, %v337, -inf
        %v354 = vrot.slane %v353, 4
        %v355 = vmax.f32 %v353, %v354
        %v356 = vrot.slane %v355, 2
        %v357 = vmax.f32 %v355, %v356
        %v358 = vrot.slane %v357, 1
        %v359 = vmax.f32 %v357, %v358
        %v360 = vsub.f32 %v336, %v352
        %v361 = vsub.f32 %v337, %v359
        %v362 = vmul.f32 %v360, 1.442695
        %v363 = vpow.pop %v362
        %v364 = vmul.f32 %v361, 1.442695
        %v365 = vpow.pop %v364
        %v366 = vsel %vm345, %v363, 0.0
        %v367 = vrot.slane %v366, 4
        %v368 = vadd.f32 %v366, %v367
        %v369 = vrot.slane %v368, 2
        %v370 = vadd.f32 %v368, %v369
        %v371 = vrot.slane %v370, 1
        %v372 = vadd.f32 %v370, %v371
        %v373 = vsel %vm345, %v365, 0.0
        %v374 = vrot.slane %v373, 4
        %v375 = vadd.f32 %v373, %v374
        %v376 = vrot.slane %v375, 2
        %v377 = vadd.f32 %v375, %v376
        %v378 = vrot.slane %v377, 1
        %v379 = vadd.f32 %v377, %v378
        %v380 = vlog2.pop %v372
        %v381 = vmul.f32 %v380, 0.6931472
        %v382 = vlog2.pop %v379
        %v383 = vmul.f32 %v382, 0.6931472
        %v384 = vsub.f32 %v360, %v381
        %v385 = vsub.f32 %v361, %v383
        %v386 = vsel %vm345, %v343, -inf
        %v387 = vrot.slane %v386, 4
        %v388 = vmax.f32 %v386, %v387
        %v389 = vrot.slane %v388, 2
        %v390 = vmax.f32 %v388, %v389
        %v391 = vrot.slane %v390, 1
        %v392 = vmax.f32 %v390, %v391
        %v393 = vsel %vm345, %v344, -inf
        %v394 = vrot.slane %v393, 4
        %v395 = vmax.f32 %v393, %v394
        %v396 = vrot.slane %v395, 2
        %v397 = vmax.f32 %v395, %v396
        %v398 = vrot.slane %v397, 1
        %v399 = vmax.f32 %v397, %v398
        %v400 = vsub.f32 %v343, %v392
        %v401 = vsub.f32 %v344, %v399
        %v402 = vmul.f32 %v400, 1.442695
        %v403 = vpow.pop %v402
        %v404 = vmul.f32 %v401, 1.442695
        %v405 = vpow.pop %v404
        %v406 = vsel %vm345, %v403, 0.0
        %v407 = vrot.slane %v406, 4
        %v408 = vadd.f32 %v406, %v407
        %v409 = vrot.slane %v408, 2
        %v410 = vadd.f32 %v408, %v409
        %v411 = vrot.slane %v410, 1
        %v412 = vadd.f32 %v410, %v411
        %v413 = vsel %vm345, %v405, 0.0
        %v414 = vrot.slane %v413, 4
        %v415 = vadd.f32 %v413, %v414
        %v416 = vrot.slane %v415, 2
        %v417 = vadd.f32 %v415, %v416
        %v418 = vrot.slane %v417, 1
        %v419 = vadd.f32 %v417, %v418
        %v420 = vrcp.pop %v412
        %v421 = vmul.f32 %v403, %v420
        %v422 = vrcp.pop %v419
        %v423 = vmul.f32 %v405, %v422
        %v424 = vlog2.pop %v412
        %v425 = vmul.f32 %v424, 0.6931472
        %v426 = vlog2.pop %v419
        %v427 = vmul.f32 %v426, 0.6931472
        %v428 = vsub.f32 %v400, %v425
        %v429 = vsub.f32 %v401, %v427
        %v430 = vsub.f32 %v428, %v384
        %v431 = vsub.f32 %v429, %v385
        %v432 = vmul.f32 %v421, %v430
        %v433 = vmul.f32 %v423, %v431
        %v434 = vld [vmem:[#allocation2] sm:$0xff]
        %v435 = vlaneseq
        %v436 = vshrl.u32 %v435, 7
        %v437 = vsub.s32 0, %v436
        %v438 = vrot.slane %v325, %v437
        %v439 = vlaneseq
        %v440 = vshrl.u32 %v439, 7
        %v441 = vsub.s32 0, %v440
        %v442 = vrot.slane %v326, %v441
        %v443 = vmul.f32 %v432, %v438
        %v444 = vmul.f32 %v433, %v442
        %v447 = vcombine.low %v443, %v444
        %v449 = vadd.f32 %v434, %v447
        %450 = vst [vmem:[#allocation2] sm:$0xff] %v449
        %v451 = vld [vmem:[#allocation3] sm:$0x3]
        %v454 = vcombine.low %v325, %v326
        %v456 = vunpack.c.l.s4 1966171168
        %v457 = vunpack.c.0.s8 %v456
        %v458 = vlaneseq
        %v459 = vshrl.u32 %v458, 7
        %v460 = vsub.s32 %v457, %v459
        %v461 = vrot.slane %v454, %v460
        %v463 = vunpack.c.l.s4 1966171168
        %v464 = vunpack.c.0.s8 %v463
        %v465 = vlaneseq
        %v466 = vshrl.u32 %v465, 7
        %v467 = vsub.s32 %v464, %v466
        %v468 = vrot.slane %v461, %v467
        %v470 = vadd.f32 %v451, %v468
        %v471 = vlaneseq
        %vm472 = vcmp.ge.s32.totalorder %v471, 0
        %vm473 = vcmp.lt.s32.totalorder %v471, 256
        %vm474 = vmand %vm472, %vm473
        %475 = vst.msk [vmem:[#allocation3] sm:$0x3] %vm474, %v470
        // Predicated region
        $region49: #{_kld_call.1} parent=31 // pred_check
          %p476 = pneg %p287
        $region50: #{_kld_call.1} parent=31 // pred_check_branch
          %478 = sbr.rel (%p476) target = $region52
        $region51: #{_kld_call.1} parent=31 // pred_region
          %v479 = vld [vmem:[#allocation2] sm:$0xff]
          %v481 = vcombine.high %v479, %v479
          %v483 = vsel %vm345, %v479, 0.0
          %v484 = vsel %vm345, %v481, 0.0
          %v485 = vadd.f32 %v483, %v484
          %486 = vadd.xlane.f32.xlu0 %v485
          %v487 = vpop.xlane.xlu0 %486
          %v488 = vrot.slane %v487, 4
          %v489 = vadd.f32 %v487, %v488
          %v490 = vrot.slane %v489, 2
          %v491 = vadd.f32 %v489, %v490
          %v492 = vrot.slane %v491, 1
          %v493 = vadd.f32 %v491, %v492
          %s494 = vtos %v493
          %v495 = vld [vmem:[#allocation3] sm:$0x3]
          %v497 = vlaneseq
          %v498 = vshrl.u32 %v497, 7
          %v499 = vsub.s32 0, %v498
          %v500 = vrot.slane %v495, %v499
          %v501 = vlaneseq
          %v502 = vshrl.u32 %v501, 7
          %v503 = vsub.s32 1, %v502
          %v504 = vrot.slane %v495, %v503
          %vm507 = vcmask 1040384
          %v508 = vsel %vm507, %v500, 0.0
          %v509 = vsel %vm507, %v504, 0.0
          %v510 = vadd.f32 %v508, %v509
          %511 = vadd.xlane.f32.xlu0 %v510
          %v512 = vpop.xlane.xlu0 %511
          %v513 = vrot.slane %v512, 4
          %v514 = vadd.f32 %v512, %v513
          %v515 = vrot.slane %v514, 2
          %v516 = vadd.f32 %v514, %v515
          %v517 = vrot.slane %v516, 1
          %v518 = vadd.f32 %v516, %v517
          %s519 = vtos %v518
          %v520 = vstv %s494
          %521 = vst [vmem:[%s286] sm:$0x1] %v520
          %v522 = vstv %s519
          %523 = vst [vmem:[%s286 + $0x1] sm:$0x1] %v522
        $region52: #{_kld_call.1} parent=31 // pred_fallthru
          _
        %p524 = scmp.lt.s32.totalorder %s24, 1
        %s525 = scalar_select %p524, %s24, 1
        %s526 = smul.addr %s525, 2
        %s527 = scalar_lea.vmem %s3, %s526
        // Predicated region
        $region53: #{_kld_call.1} parent=31 // pred_check
          %p528 = pneg %p134
        $region54: #{_kld_call.1} parent=31 // pred_check_branch
          %530 = sbr.rel (%p528) target = $region56
        $region55: #{_kld_call.1} parent=31 // pred_region
          _
        $region56: #{_kld_call.1} parent=31 // pred_fallthru
          _
      $region32: #{_kld_call.1} parent=5 // pred_fallthru
        _
      %p531 = scmp.le.s32.totalorder 2, %s15
      // Predicated region
      $region57: #{_kld_call.1} parent=5 // pred_check
        %p532 = pneg %p531
      $region58: #{_kld_call.1} parent=5 // pred_check_branch
        %534 = sbr.rel (%p532) target = $region60
      $region59: #{_kld_call.1} parent=5 // pred_region
        %s535 = ssub.s32 %s15, 2
        // Predicated region
        $region61: #{_kld_call.1} parent=59 // pred_check
          %p536 = pneg %p140
        $region62: #{_kld_call.1} parent=59 // pred_check_branch
          %538 = sbr.rel (%p536) target = $region64
        $region63: #{_kld_call.1} parent=59 // pred_region
          %p539 = scmp.lt.s32.totalorder %s26, 1
          %s540 = scalar_select %p539, %s26, 1
          %s541 = smul.addr %s540, 2
          %s542 = scalar_lea.vmem %s3, %s541
        $region64: #{_kld_call.1} parent=59 // pred_fallthru
          _
      $region60: #{_kld_call.1} parent=5 // pred_fallthru
        _
    $region6: #{_kld_call.1} parent=1 // loop_footer
      %s19 = sadd.s32 1, %s15
    $region7: #{_kld_call.1} parent=1 // loop_footer_branch
      %14 = sbr.rel target = $region3
    $region8: #{_kld_call.1} parent=1 // loop_exit
      _
    %543 = vsyncpa [#allocation5], 1
    %s544 = scalar_lea.sflag [#allocation5], 1
    %545 = vsyncpa %s544, 1
    %546 = vsyncpa [#allocation7], 1
    %s547 = scalar_lea.sflag [#allocation7], 1
    %548 = vsyncpa %s547, 1

</llo_original>
